<compile_context>
chip_gen: v6e
topology: v6e:2x2x1
jax: 0.10.0
libtpu: 0.0.40
codegen_flags: <defaults>
</compile_context>

<pallas_src>
import jax
import jax.numpy as jnp
from jax.experimental import pallas as pl
from jax.experimental.pallas import tpu as pltpu

_MIB = 1024 * 1024


def _round_up(x, m):
    return (x + m - 1) // m * m


# ---------------------------------------------------------------------------
# Kernel bodies
# ---------------------------------------------------------------------------

def _ffn_body(x_ref, w1_ref, b1_ref, w2_ref, b2_ref, acc_ref):
    """One (row-tile i, d_ff k-tile) step; f32 partial accumulated into acc_ref."""
    k = pl.program_id(1)

    # First linear slab: (tm, d_model) @ (d_model, tk) -> (tm, tk), f32 acc.
    h = jnp.dot(x_ref[...], w1_ref[...], preferred_element_type=jnp.float32)
    # Bias + ReLU on the VPU (free filler while MXU-bound).  Biases are f32.
    h = jnp.maximum(h + b1_ref[...], 0.0)
    # (dropout: identity in eval mode)

    # Second linear partial: (tm, tk) @ (tk, d_model) -> (tm, d_model), f32 acc.
    part = jnp.dot(h.astype(w2_ref.dtype), w2_ref[...],
                   preferred_element_type=jnp.float32)

    @pl.when(k == 0)
    def _first():
        # Fold the output bias into the first partial: saves a zero-init store
        # pass over (tm, d_model) and the bias add at finalize.
        acc_ref[...] = part + b2_ref[...]

    @pl.when(k > 0)
    def _rest():
        acc_ref[...] += part


def _ffn_kernel_f32_out(x_ref, w1_ref, b1_ref, w2_ref, b2_ref, o_ref):
    # f32 output: the output block itself is VMEM-resident across k (its block
    # index is constant over k), so accumulate straight into it — no scratch.
    _ffn_body(x_ref, w1_ref, b1_ref, w2_ref, b2_ref, o_ref)


def _ffn_kernel_scratch(x_ref, w1_ref, b1_ref, w2_ref, b2_ref, o_ref, acc_ref):
    # Non-f32 output: accumulate in an f32 VMEM scratch, cast once at the end.
    _ffn_body(x_ref, w1_ref, b1_ref, w2_ref, b2_ref, acc_ref)

    @pl.when(pl.program_id(1) == pl.num_programs(1) - 1)
    def _finalize():
        o_ref[...] = acc_ref[...].astype(o_ref.dtype)


# ---------------------------------------------------------------------------
# Per-generation config & VMEM budgeting
# ---------------------------------------------------------------------------

def _tpu_vmem_capacity():
    try:
        return int(pltpu.get_tpu_info().vmem_capacity_bytes)
    except Exception:
        return 64 * _MIB  # conservative (v7x-class) fallback


def _generation_defaults():
    cap = _tpu_vmem_capacity()
    if cap >= 96 * _MIB:
        # v5e / v6e class (128 MiB VMEM): big tiles, raised scoped-VMEM limit.
        return dict(tm=768, tk=512, vmem_limit=100 * _MIB)
    # v7x class (64 MiB VMEM per TensorCore): its own, smaller tile set.
    return dict(tm=512, tk=256, vmem_limit=52 * _MIB)


def _vmem_bytes(tm, tk, d_model, x_item, w_item, out_item, use_scratch):
    """Rough scoped-VMEM footprint of one tile set (BlockSpecs double-buffer)."""
    w_slabs = 2 * 2 * d_model * tk * w_item          # W1 + W2 slabs, 2 buffers
    x_blk = 2 * tm * d_model * x_item
    o_blk = 2 * tm * d_model * out_item
    bias = 2 * (tk + d_model) * 4
    acc = tm * d_model * 4 if use_scratch else 0
    h_tmp = tm * tk * 4                              # f32 intermediate between dots
    return w_slabs + x_blk + o_blk + bias + acc + h_tmp


# ---------------------------------------------------------------------------
# Factory: prepare weights once, return a cheap apply(x)
# ---------------------------------------------------------------------------

def make_feed_forward(w1, b1, w2, b2, *, compute_dtype=jnp.bfloat16,
                      tm=None, tk=None):
    """Build  y = relu(x @ w1 + b1) @ w2 + b2  (eval-mode dropout = identity).

    w1: (d_model, d_ff); b1: (d_ff,); w2: (d_ff, d_model); b2: (d_model,)
    (i.e. transposed vs torch.nn.Linear.weight).  Weight cast / padding happens
    ONCE here, outside the per-call hot path.  compute_dtype is the carry dtype
    for x / W1 / W2 (accumulation is always f32); None keeps the given dtypes.
    The output keeps x's dtype.
    """
    d_model, d_ff = w1.shape
    assert w2.shape == (d_ff, d_model), "w2 must be (d_ff, d_model)"

    cfg = _generation_defaults()
    tm_def = int(tm) if tm is not None else cfg["tm"]
    vmem_limit = cfg["vmem_limit"]
    budget = int(vmem_limit * 0.85)

    if compute_dtype is not None:
        w1 = w1.astype(compute_dtype)
        w2 = w2.astype(compute_dtype)
    # Biases stay f32: they feed straight into the f32 accumulators.
    b1 = b1.astype(jnp.float32)
    b2 = b2.astype(jnp.float32)
    w_item = jnp.dtype(w1.dtype).itemsize

    # ---- d_ff (reduction) tile selection --------------------------------
    if tk is not None:
        tk_sel = min(int(tk), d_ff)
    else:
        # Prefer full-d_ff residency: the W1/W2 block indices are then constant
        # over the whole grid, so the weights are DMA'd from HBM exactly once.
        # (Budget check is conservative: f32 activations + scratch at tm_def.)
        if _vmem_bytes(tm_def, d_ff, d_model, 4, w_item, 4, True) <= budget:
            tk_sel = d_ff
        else:
            tk_sel = min(cfg["tk"], _round_up(d_ff, 128))
    if tk_sel < d_ff:
        tk_sel = _round_up(tk_sel, 128)
        d_ff_p = _round_up(d_ff, tk_sel)
    else:
        tk_sel = d_ff
        d_ff_p = d_ff

    # Zero-pad d_ff once (relu(0 + 0) = 0 contributes nothing through W2 rows).
    if d_ff_p != d_ff:
        pad = d_ff_p - d_ff
        w1 = jnp.pad(w1, ((0, 0), (0, pad)))
        b1 = jnp.pad(b1, ((0, pad),))
        w2 = jnp.pad(w2, ((0, pad), (0, 0)))

    b1_2d = b1.reshape(1, d_ff_p)
    b2_2d = b2.reshape(1, d_model)

    def apply(x):
        orig_shape = x.shape
        assert orig_shape[-1] == d_model
        out_dtype = x.dtype
        if compute_dtype is not None:
            x = x.astype(compute_dtype)
        xf = x.reshape(-1, d_model)
        M = xf.shape[0]

        x_item = jnp.dtype(xf.dtype).itemsize
        out_item = jnp.dtype(out_dtype).itemsize
        use_scratch = out_dtype != jnp.float32

        # Row tile: per-generation default, clamped to the problem; multiples
        # of 256 for full MXU passes on real sizes, 8 for tiny ones.
        tm_sel = min(tm_def, _round_up(M, 8))
        tm_sel = _round_up(tm_sel, 256) if tm_sel >= 256 else _round_up(tm_sel, 8)
        # Shrink row tile if the tile set would not fit the scoped-VMEM budget.
        while (tm_sel > 256 and
               _vmem_bytes(tm_sel, tk_sel, d_model, x_item, w_item, out_item,
                           use_scratch) > budget):
            tm_sel -= 256

        Mp = _round_up(M, tm_sel)
        if Mp != M:
            xf = jnp.pad(xf, ((0, Mp - M), (0, 0)))

        grid = (Mp // tm_sel, d_ff_p // tk_sel)
        nk = grid[1]

        # HBM traffic: weights re-stream once per row tile when k-tiled, but
        # exactly once when tk == d_ff (constant block index over the grid).
        w_stream = 1 if nk == 1 else grid[0]
        bytes_accessed = int(xf.size * x_item
                             + w_stream * (w1.size + w2.size) * w_item
                             + (b1_2d.size + b2_2d.size) * 4
                             + Mp * d_model * out_item)
        flops = int(2 * (2 * Mp * d_model * d_ff_p))

        in_specs = [
            pl.BlockSpec((tm_sel, d_model), lambda i, k: (i, 0)),   # x rows
            pl.BlockSpec((d_model, tk_sel), lambda i, k: (0, k)),   # W1 k-slab
            pl.BlockSpec((1, tk_sel), lambda i, k: (0, k)),         # b1 k-slab
            pl.BlockSpec((tk_sel, d_model), lambda i, k: (k, 0)),   # W2 k-slab
            pl.BlockSpec((1, d_model), lambda i, k: (0, 0)),        # b2
        ]
        out_spec = pl.BlockSpec((tm_sel, d_model), lambda i, k: (i, 0))

        if use_scratch:
            kernel = _ffn_kernel_scratch
            scratch = [pltpu.VMEM((tm_sel, d_model), jnp.float32)]
        else:
            kernel = _ffn_kernel_f32_out
            scratch = []

        out = pl.pallas_call(
            kernel,
            out_shape=jax.ShapeDtypeStruct((Mp, d_model), out_dtype),
            grid_spec=pltpu.PrefetchScalarGridSpec(
                num_scalar_prefetch=0,
                grid=grid,
                in_specs=in_specs,
                out_specs=out_spec,
                scratch_shapes=scratch,
            ),
            compiler_params=pltpu.CompilerParams(
                dimension_semantics=("parallel", "arbitrary"),
                vmem_limit_bytes=vmem_limit,
            ),
            cost_estimate=pl.CostEstimate(flops=flops, transcendentals=0,
                                          bytes_accessed=bytes_accessed),
        )(xf, w1, b1_2d, w2, b2_2d)

        if Mp != M:
            out = out[:M]
        return out.reshape(orig_shape)

    return apply


def feed_forward_block(x, w1, b1, w2, b2, *, compute_dtype=jnp.bfloat16,
                       tm=None, tk=None):
    """One-shot convenience wrapper (prefer make_feed_forward for repeated calls)."""
    return make_feed_forward(w1, b1, w2, b2, compute_dtype=compute_dtype,
                             tm=tm, tk=tk)(x)


if __name__ == "__main__":
    key = jax.random.PRNGKey(0)

    def init(key, batch, seq, d_model, d_ff, dtype=jnp.float32):
        kx, k1, kb1, k2, kb2 = jax.random.split(key, 5)
        x = jax.random.normal(kx, (batch, seq, d_model), dtype=dtype)
        # torch Linear params (stored transposed: (in, out)).
        w1 = jax.random.normal(k1, (d_model, d_ff), dtype=dtype) * 0.1
        b1 = jax.random.normal(kb1, (d_ff,), dtype=dtype) * 0.1
        w2 = jax.random.normal(k2, (d_ff, d_model), dtype=dtype) * 0.1
        b2 = jax.random.normal(kb2, (d_model,), dtype=dtype) * 0.1
        return x, w1, b1, w2, b2

    def ref_ffn(x, w1, b1, w2, b2):
        return jnp.maximum(x @ w1 + b1, 0.0) @ w2 + b2

    ka, kb = jax.random.split(key)

    # 1. Default production path: bf16 carry (f32 accumulation), weights
    #    prepared once, full-d_ff residency (single k tile), f32 output block
    #    used directly as the accumulator.
    x, w1, b1, w2, b2 = init(ka, batch=2, seq=8, d_model=128, d_ff=256)
    ffn_bf16 = make_feed_forward(w1, b1, w2, b2)  # compute_dtype=bf16 default
    y = jax.block_until_ready(ffn_bf16(x))
    assert y.shape == x.shape and y.dtype == x.dtype
    assert jnp.allclose(y, ref_ffn(x, w1, b1, w2, b2), atol=0.1, rtol=0.1), \
        "bf16 default path mismatch vs reference"

    # 2. f32 path with a forced d_ff reduction (multi k-tile), accumulating
    #    directly into the f32 output block (no scratch).
    ffn_f32_ktiled = make_feed_forward(w1, b1, w2, b2, compute_dtype=None,
                                       tk=128)
    y2 = jax.block_until_ready(ffn_f32_ktiled(x))
    assert jnp.allclose(y2, ref_ffn(x, w1, b1, w2, b2),
                        atol=1e-4, rtol=1e-4), "f32 multi-k-tile mismatch"

    # 3. Tiny non-128 dims, token count not a multiple of 8 (padding path,
    #    full-extent weight tiles), exact f32.
    x3, w13, b13, w23, b23 = init(kb, batch=2, seq=7, d_model=32, d_ff=64)
    y3 = jax.block_until_ready(
        make_feed_forward(w13, b13, w23, b23, compute_dtype=None)(x3))
    assert y3.shape == x3.shape
    assert jnp.allclose(y3, ref_ffn(x3, w13, b13, w23, b23),
                        atol=1e-4, rtol=1e-4), "f32 tiny-shape mismatch"

    # 4. bf16 activations + bf16 output: exercises the scratch-accumulator
    #    kernel variant with a k-tiled reduction.
    xb = x.astype(jnp.bfloat16)
    y4 = jax.block_until_ready(make_feed_forward(w1, b1, w2, b2, tk=128)(xb))
    assert y4.dtype == jnp.bfloat16
    assert jnp.allclose(y4.astype(jnp.float32), ref_ffn(x, w1, b1, w2, b2),
                        atol=0.15, rtol=0.1), "bf16-output mismatch"

    print("KERNEL_OK")
</pallas_src>

<mosaic_0001>
module attributes {stable_mosaic.version = 11 : i64} {
  func.func @_ffn_kernel_f32_out(%arg0: i32, %arg1: i32, %arg2: memref<16x128xbf16, #tpu.memory_space<vmem>>, %arg3: memref<128x256xbf16, #tpu.memory_space<vmem>>, %arg4: memref<1x256xf32, #tpu.memory_space<vmem>>, %arg5: memref<256x128xbf16, #tpu.memory_space<vmem>>, %arg6: memref<1x128xf32, #tpu.memory_space<vmem>>, %arg7: memref<16x128xf32, #tpu.memory_space<vmem>>) attributes {dimension_semantics = [#tpu.dimension_semantics<parallel>, #tpu.dimension_semantics<arbitrary>], iteration_bounds = array<i64: 1, 1>, scalar_prefetch = 0 : i64, scratch_operands = 0 : i64, tpu.core_type = #tpu.core_type<tc>, window_params = [{transform_indices = @transform_0, window_bounds = array<i64: 16, 128>}, {transform_indices = @transform_1, window_bounds = array<i64: 128, 256>}, {transform_indices = @transform_2, window_bounds = array<i64: 1, 256>}, {transform_indices = @transform_3, window_bounds = array<i64: 256, 128>}, {pipeline_mode = #tpu.pipeline_mode<synchronous>, transform_indices = @transform_4, window_bounds = array<i64: 1, 128>}, {transform_indices = @transform_5, window_bounds = array<i64: 16, 128>}]} {
    %c0 = arith.constant 0 : index
    %c0_0 = arith.constant 0 : index
    %0 = vector.load %arg2[%c0, %c0_0] : memref<16x128xbf16, #tpu.memory_space<vmem>>, vector<16x128xbf16>
    %c0_1 = arith.constant 0 : index
    %c0_2 = arith.constant 0 : index
    %1 = vector.load %arg3[%c0_1, %c0_2] : memref<128x256xbf16, #tpu.memory_space<vmem>>, vector<128x256xbf16>
    %cst = arith.constant dense<0.000000e+00> : vector<16x256xf32>
    %2 = tpu.matmul %0, %1, %cst {dimension_numbers = #tpu.dot_dimension_numbers<[1], [0], [0], [1], [0, 0, 1, 1], [], []>} : vector<16x128xbf16>, vector<128x256xbf16>, vector<16x256xf32> -> vector<16x256xf32>
    %c0_3 = arith.constant 0 : index
    %c0_4 = arith.constant 0 : index
    %3 = vector.load %arg4[%c0_3, %c0_4] : memref<1x256xf32, #tpu.memory_space<vmem>>, vector<1x256xf32>
    %4 = vector.broadcast %3 : vector<1x256xf32> to vector<16x256xf32>
    %5 = arith.addf %2, %4 : vector<16x256xf32>
    %cst_5 = arith.constant 0.000000e+00 : f32
    %6 = vector.broadcast %cst_5 : f32 to vector<16x256xf32>
    %7 = arith.maximumf %5, %6 : vector<16x256xf32>
    %8 = arith.truncf %7 : vector<16x256xf32> to vector<16x256xbf16>
    %c0_6 = arith.constant 0 : index
    %c0_7 = arith.constant 0 : index
    %9 = vector.load %arg5[%c0_6, %c0_7] : memref<256x128xbf16, #tpu.memory_space<vmem>>, vector<256x128xbf16>
    %cst_8 = arith.constant dense<0.000000e+00> : vector<16x128xf32>
    %10 = tpu.matmul %8, %9, %cst_8 {dimension_numbers = #tpu.dot_dimension_numbers<[1], [0], [0], [1], [0, 0, 1, 1], [], []>} : vector<16x256xbf16>, vector<256x128xbf16>, vector<16x128xf32> -> vector<16x128xf32>
    %c0_i32 = arith.constant 0 : i32
    %11 = arith.cmpi eq, %arg1, %c0_i32 : i32
    %12 = arith.extui %11 : i1 to i32
    %c0_i32_9 = arith.constant 0 : i32
    %13 = arith.cmpi ne, %12, %c0_i32_9 : i32
    scf.if %13 {
      %c0_12 = arith.constant 0 : index
      %c0_13 = arith.constant 0 : index
      %17 = vector.load %arg6[%c0_12, %c0_13] : memref<1x128xf32, #tpu.memory_space<vmem>>, vector<1x128xf32>
      %18 = vector.broadcast %17 : vector<1x128xf32> to vector<16x128xf32>
      %19 = arith.addf %10, %18 : vector<16x128xf32>
      %c0_14 = arith.constant 0 : index
      %c0_15 = arith.constant 0 : index
      %20 = vector.load %arg7[%c0_14, %c0_15] : memref<16x128xf32, #tpu.memory_space<vmem>>, vector<16x128xf32>
      tpu.vector_store %arg7[%c0_14, %c0_15], %19 {strides = array<i32>} : memref<16x128xf32, #tpu.memory_space<vmem>>, vector<16x128xf32>,
    } else {
    }
    %c0_i32_10 = arith.constant 0 : i32
    %14 = arith.cmpi sgt, %arg1, %c0_i32_10 : i32
    %15 = arith.extui %14 : i1 to i32
    %c0_i32_11 = arith.constant 0 : i32
    %16 = arith.cmpi ne, %15, %c0_i32_11 : i32
    scf.if %16 {
      %c0_12 = arith.constant 0 : index
      %c0_13 = arith.constant 0 : index
      %17 = vector.load %arg7[%c0_12, %c0_13] : memref<16x128xf32, #tpu.memory_space<vmem>>, vector<16x128xf32>
      %18 = arith.addf %17, %10 : vector<16x128xf32>
      %c0_14 = arith.constant 0 : index
      %c0_15 = arith.constant 0 : index
      %19 = vector.load %arg7[%c0_14, %c0_15] : memref<16x128xf32, #tpu.memory_space<vmem>>, vector<16x128xf32>
      tpu.vector_store %arg7[%c0_14, %c0_15], %18 {strides = array<i32>} : memref<16x128xf32, #tpu.memory_space<vmem>>, vector<16x128xf32>,
    } else {
    }
    return
  }
  func.func @transform_0(%arg0: i32, %arg1: i32) -> (i32, i32) {
    %c0_i32 = arith.constant 0 : i32
    %c0_i32_0 = arith.constant 0 : i32
    return %arg0, %c0_i32 : i32, i32
  }
  func.func @transform_1(%arg0: i32, %arg1: i32) -> (i32, i32) {
    %c0_i32 = arith.constant 0 : i32
    %c0_i32_0 = arith.constant 0 : i32
    return %c0_i32, %arg1 : i32, i32
  }
  func.func @transform_2(%arg0: i32, %arg1: i32) -> (i32, i32) {
    %c0_i32 = arith.constant 0 : i32
    %c0_i32_0 = arith.constant 0 : i32
    return %c0_i32, %arg1 : i32, i32
  }
  func.func @transform_3(%arg0: i32, %arg1: i32) -> (i32, i32) {
    %c0_i32 = arith.constant 0 : i32
    %c0_i32_0 = arith.constant 0 : i32
    return %arg1, %c0_i32 : i32, i32
  }
  func.func @transform_4(%arg0: i32, %arg1: i32) -> (i32, i32) {
    %c0_i32 = arith.constant 0 : i32
    %c0_i32_0 = arith.constant 0 : i32
    %c0_i32_1 = arith.constant 0 : i32
    return %c0_i32, %c0_i32_0 : i32, i32
  }
  func.func @transform_5(%arg0: i32, %arg1: i32) -> (i32, i32) {
    %c0_i32 = arith.constant 0 : i32
    %c0_i32_0 = arith.constant 0 : i32
    return %arg0, %c0_i32 : i32, i32
  }
}

</mosaic_0001>

<llo_original>
// kernel: tpu_custom_call.1
$region0: #{tpu_custom_call.1}
  #allocation0 [shape = 'u32[]', space=smem, size = 0x4, offset = 0x4, fixed_abs, tag = 'smem constant byte address 0x4 - core index']
  #allocation1 [shape = 'u32[144,128]{1,0:T(1,128)}', space=vmem, size = 0x12000, scoped, tag = 'internal scratch']
  %s0 = inlined_call_operand.hbm [shape: bf16[16,128], index: 0, kind: input, shape index: {}]
  %s1 = inlined_call_operand.hbm [shape: bf16[128,256], index: 1, kind: input, shape index: {}]
  %s2 = inlined_call_operand.vmem [shape: f32[1,256], index: 2, kind: input, shape index: {}]
  %s3 = inlined_call_operand.hbm [shape: bf16[256,128], index: 3, kind: input, shape index: {}]
  %s4 = inlined_call_operand.vmem [shape: f32[1,128], index: 4, kind: input, shape index: {}]
  %s5 = inlined_call_operand.hbm [shape: f32[16,128], index: 5, kind: output, shape index: {}]
  %s6 = sld [smem:[#allocation0]]
  $region50: #{tpu_custom_call.1} parent=0
    _
  %s8 = ssub.s32 1, %s6
  %s9 = scalar_select 0, %s8, %s6
  $region1: #{tpu_custom_call.1} parent=0
    #allocation2 [shape = 'u8[4096]{0}', space=vmem, size = 0x1000, scoped, tag = 'input window, operand 0, single buffered']
    #allocation3 [shape = 's32[1]{0}', space=sflag, size = 0x4, scoped, tag = 'scoped memory for tpu_custom_call.1']
    #allocation4 [shape = 's32[1]{0}', space=sflag, size = 0x4, scoped, tag = 'scoped memory for tpu_custom_call.1']
    #allocation5 [shape = 'u8[65536]{0}', space=vmem, size = 0x10000, scoped, tag = 'input window, operand 1, single buffered']
    #allocation6 [shape = 's32[1]{0}', space=sflag, size = 0x4, scoped, tag = 'scoped memory for tpu_custom_call.1']
    #allocation7 [shape = 'u8[65536]{0}', space=vmem, size = 0x10000, scoped, tag = 'input window, operand 3, single buffered']
    #allocation8 [shape = 'u8[8192]{0}', space=vmem, size = 0x2000, scoped, tag = 'output window, operand 0, single buffered']
    %10 = vsyncpa [#allocation3], 0
    %11 = vsyncpa [#allocation6], 0
    %12 = vsyncpa [#allocation4], 0
    // Predicated region
    $region2: #{tpu_custom_call.1} parent=1 // pred_check
      _
    $region3: #{tpu_custom_call.1} parent=1 // pred_check_branch
      %14 = sbr.rel (0) target = $region5
    $region4: #{tpu_custom_call.1} parent=1 // pred_region
      %s16 = ssub.s32 128, 128
      %17 = vsyncadd [#allocation3], %s16
      %s18 = sshll.u32 [#allocation2], 4
      %s19 = int_to_ptr.vmem [resolvable:$true] %s18
      %24 = dma.hbm_to_vmem [thread:$0]  %s0, 128, %s19, [#allocation3], 64, 64, 4
    $region5: #{tpu_custom_call.1} parent=1 // pred_fallthru
      _
    // Predicated region
    $region6: #{tpu_custom_call.1} parent=1 // pred_check
      _
    $region7: #{tpu_custom_call.1} parent=1 // pred_check_branch
      %26 = sbr.rel (0) target = $region9
    $region8: #{tpu_custom_call.1} parent=1 // pred_region
      %s28 = ssub.s32 2048, 2048
      %29 = vsyncadd [#allocation6], %s28
      %s30 = sshll.u32 [#allocation5], 4
      %s31 = int_to_ptr.vmem [resolvable:$true] %s30
      %36 = dma.hbm_to_vmem [thread:$0]  %s1, 2048, %s31, [#allocation6], 128, 128, 8
    $region9: #{tpu_custom_call.1} parent=1 // pred_fallthru
      _
    // Predicated region
    $region10: #{tpu_custom_call.1} parent=1 // pred_check
      _
    $region11: #{tpu_custom_call.1} parent=1 // pred_check_branch
      %38 = sbr.rel (0) target = $region13
    $region12: #{tpu_custom_call.1} parent=1 // pred_region
      _
    $region13: #{tpu_custom_call.1} parent=1 // pred_fallthru
      _
    // Predicated region
    $region14: #{tpu_custom_call.1} parent=1 // pred_check
      _
    $region15: #{tpu_custom_call.1} parent=1 // pred_check_branch
      %40 = sbr.rel (0) target = $region17
    $region16: #{tpu_custom_call.1} parent=1 // pred_region
      %s42 = ssub.s32 2048, 2048
      %43 = vsyncadd [#allocation6], %s42
      %s44 = sshll.u32 [#allocation7], 4
      %s45 = int_to_ptr.vmem [resolvable:$true] %s44
      %50 = dma.hbm_to_vmem [thread:$0]  %s3, 2048, %s45, [#allocation6], 64, 64, 4
    $region17: #{tpu_custom_call.1} parent=1 // pred_fallthru
      _
    // Predicated region
    $region18: #{tpu_custom_call.1} parent=1 // pred_check
      _
    $region19: #{tpu_custom_call.1} parent=1 // pred_check_branch
      %52 = sbr.rel (0) target = $region21
    $region20: #{tpu_custom_call.1} parent=1 // pred_region
      _
    $region21: #{tpu_custom_call.1} parent=1 // pred_fallthru
      _
    // Predicated region
    $region22: #{tpu_custom_call.1} parent=1 // pred_check
      _
    $region23: #{tpu_custom_call.1} parent=1 // pred_check_branch
      %54 = sbr.rel (0) target = $region25
    $region24: #{tpu_custom_call.1} parent=1 // pred_region
      %55 = dma.done [#allocation3], 128
    $region25: #{tpu_custom_call.1} parent=1 // pred_fallthru
      _
    // Predicated region
    $region26: #{tpu_custom_call.1} parent=1 // pred_check
      _
    $region27: #{tpu_custom_call.1} parent=1 // pred_check_branch
      %57 = sbr.rel (0) target = $region29
    $region28: #{tpu_custom_call.1} parent=1 // pred_region
      %58 = dma.done [#allocation6], 2048
    $region29: #{tpu_custom_call.1} parent=1 // pred_fallthru
      _
    // Predicated region
    $region30: #{tpu_custom_call.1} parent=1 // pred_check
      _
    $region31: #{tpu_custom_call.1} parent=1 // pred_check_branch
      %60 = sbr.rel (0) target = $region33
    $region32: #{tpu_custom_call.1} parent=1 // pred_region
      %61 = dma.done [#allocation6], 2048
    $region33: #{tpu_custom_call.1} parent=1 // pred_fallthru
      _
    %v63 = vld [vmem:[#allocation2] sm:$0xf]
    %v64 = vld [vmem:[#allocation2 + $0x4] sm:$0xf]
    %v65 = vld [vmem:[#allocation5] sm:$0xff]
    %v66 = vld [vmem:[#allocation5 + $0x8] sm:$0xff]
    %v67 = vld [vmem:[#allocation5 + $0x10] sm:$0xff]
    %v68 = vld [vmem:[#allocation5 + $0x18] sm:$0xff]
    %v69 = vld [vmem:[#allocation5 + $0x20] sm:$0xff]
    %v70 = vld [vmem:[#allocation5 + $0x28] sm:$0xff]
    %v71 = vld [vmem:[#allocation5 + $0x30] sm:$0xff]
    %v72 = vld [vmem:[#allocation5 + $0x38] sm:$0xff]
    %v73 = vld [vmem:[#allocation5 + $0x40] sm:$0xff]
    %v74 = vld [vmem:[#allocation5 + $0x48] sm:$0xff]
    %v75 = vld [vmem:[#allocation5 + $0x50] sm:$0xff]
    %v76 = vld [vmem:[#allocation5 + $0x58] sm:$0xff]
    %v77 = vld [vmem:[#allocation5 + $0x60] sm:$0xff]
    %v78 = vld [vmem:[#allocation5 + $0x68] sm:$0xff]
    %v79 = vld [vmem:[#allocation5 + $0x70] sm:$0xff]
    %v80 = vld [vmem:[#allocation5 + $0x78] sm:$0xff]
    %v81 = vld [vmem:[%s2] sm:$0x3]
    %v83 = vlaneseq
    %v84 = vshrl.u32 %v83, 7
    %v85 = vsub.s32 0, %v84
    %v86 = vrot.slane %v81, %v85
    %v87 = vlaneseq
    %v88 = vshrl.u32 %v87, 7
    %v89 = vsub.s32 1, %v88
    %v90 = vrot.slane %v81, %v89
    %v95 = vunpack.c.l.b16 %v63
    %v96 = vunpack.c.l.b16 %v64
    %v97 = vpack.c.b16 %v96, %v95
    %v115 = vunpack.c.l.b16 %v65
    %v116 = vunpack.c.h.b16 %v65
    %v117 = vunpack.c.l.b16 %v66
    %v118 = vunpack.c.h.b16 %v66
    %v119 = vunpack.c.l.b16 %v67
    %v120 = vunpack.c.h.b16 %v67
    %v121 = vunpack.c.l.b16 %v68
    %v122 = vunpack.c.h.b16 %v68
    %v123 = vunpack.c.l.b16 %v69
    %v124 = vunpack.c.h.b16 %v69
    %v125 = vunpack.c.l.b16 %v70
    %v126 = vunpack.c.h.b16 %v70
    %v127 = vunpack.c.l.b16 %v71
    %v128 = vunpack.c.h.b16 %v71
    %v129 = vunpack.c.l.b16 %v72
    %v130 = vunpack.c.h.b16 %v72
    %v131 = vunpack.c.l.b16 %v73
    %v132 = vunpack.c.h.b16 %v73
    %v133 = vunpack.c.l.b16 %v74
    %v134 = vunpack.c.h.b16 %v74
    %v135 = vunpack.c.l.b16 %v75
    %v136 = vunpack.c.h.b16 %v75
    %v137 = vunpack.c.l.b16 %v76
    %v138 = vunpack.c.h.b16 %v76
    %v139 = vunpack.c.l.b16 %v77
    %v140 = vunpack.c.h.b16 %v77
    %v141 = vunpack.c.l.b16 %v78
    %v142 = vunpack.c.h.b16 %v78
    %v143 = vunpack.c.l.b16 %v79
    %v144 = vunpack.c.h.b16 %v79
    %v145 = vunpack.c.l.b16 %v80
    %v146 = vunpack.c.h.b16 %v80
    %v147 = vpack.c.b16 %v117, %v115
    %v148 = vpack.c.b16 %v118, %v116
    %v149 = vpack.c.b16 %v121, %v119
    %v150 = vpack.c.b16 %v122, %v120
    %v151 = vpack.c.b16 %v125, %v123
    %v152 = vpack.c.b16 %v126, %v124
    %v153 = vpack.c.b16 %v129, %v127
    %v154 = vpack.c.b16 %v130, %v128
    %v155 = vpack.c.b16 %v133, %v131
    %v156 = vpack.c.b16 %v134, %v132
    %v157 = vpack.c.b16 %v137, %v135
    %v158 = vpack.c.b16 %v138, %v136
    %v159 = vpack.c.b16 %v141, %v139
    %v160 = vpack.c.b16 %v142, %v140
    %v161 = vpack.c.b16 %v145, %v143
    %v162 = vpack.c.b16 %v146, %v144
    %179 = vmatprep.subr.bf16.mxu0 %v162
    %180 = vmatpush1.bf16.msra.mxu0 %v161
    %181 = vmatprep.subr.bf16.mxu0 %v160
    %182 = vmatpush1.bf16.msra.mxu0 %v159
    %183 = vmatprep.subr.bf16.mxu0 %v158
    %184 = vmatpush1.bf16.msra.mxu0 %v157
    %185 = vmatprep.subr.bf16.mxu0 %v156
    %186 = vmatpush1.bf16.msra.mxu0 %v155
    %187 = vmatprep.subr.bf16.mxu0 %v154
    %188 = vmatpush1.bf16.msra.mxu0 %v153
    %189 = vmatprep.subr.bf16.mxu0 %v152
    %190 = vmatpush1.bf16.msra.mxu0 %v151
    %191 = vmatprep.subr.bf16.mxu0 %v150
    %192 = vmatpush1.bf16.msra.mxu0 %v149
    %193 = vmatprep.subr.bf16.mxu0 %v148
    %194 = vmatpush1.bf16.msra.mxu0 %v147
    %195 = vmatprep.subr.bf16.mxu0 0
    %196 = vmatpush2.bf16.msra.mxu0 0
    %197 = vmatprep.subr.bf16.mxu0 0
    %198 = vmatpush2.bf16.msra.mxu0 0
    %199 = vmatprep.subr.bf16.mxu0 0
    %200 = vmatpush2.bf16.msra.mxu0 0
    %201 = vmatprep.subr.bf16.mxu0 0
    %202 = vmatpush2.bf16.msra.mxu0 0
    %203 = vmatprep.subr.bf16.mxu0 0
    %204 = vmatpush2.bf16.msra.mxu0 0
    %205 = vmatprep.subr.bf16.mxu0 0
    %206 = vmatpush2.bf16.msra.mxu0 0
    %207 = vmatprep.subr.bf16.mxu0 0
    %208 = vmatpush2.bf16.msra.mxu0 0
    %209 = vmatprep.subr.bf16.mxu0 0
    %210 = vmatpush2.bf16.msra.mxu0 0
    %211 = vmatprep.mubr.bf16.mxu0 0
    %212 = vmatmul.mubr.bf16.gmra.mxu0 %v97
    %v213 = vpop.f32.mrf.mxu0
    %v214 = vadd.f32 %v86, %v213
    %v215 = vpop.f32.mrf.mxu0
    %v216 = vadd.f32 %v90, %v215
    %v217 = vpop.f32.mrf.mxu0
    %v218 = vadd.f32 %v86, %v217
    %v219 = vpop.f32.mrf.mxu0
    %v220 = vadd.f32 %v90, %v219
    %221 = vdwg.mxu0
    %v222 = vmax.f32 %v214, 0.0
    %v223 = vmax.f32 %v216, 0.0
    %v224 = vmax.f32 %v218, 0.0
    %v225 = vmax.f32 %v220, 0.0
    %v226 = vpack.c.bf16 %v224, %v222
    %v227 = vpack.c.bf16 %v225, %v223
    %v228 = vld [vmem:[#allocation7] sm:$0xf]
    %v229 = vld [vmem:[#allocation7 + $0x4] sm:$0xf]
    %v230 = vld [vmem:[#allocation7 + $0x8] sm:$0xf]
    %v231 = vld [vmem:[#allocation7 + $0xc] sm:$0xf]
    %v232 = vld [vmem:[#allocation7 + $0x10] sm:$0xf]
    %v233 = vld [vmem:[#allocation7 + $0x14] sm:$0xf]
    %v234 = vld [vmem:[#allocation7 + $0x18] sm:$0xf]
    %v235 = vld [vmem:[#allocation7 + $0x1c] sm:$0xf]
    %v236 = vld [vmem:[#allocation7 + $0x20] sm:$0xf]
    %v237 = vld [vmem:[#allocation7 + $0x24] sm:$0xf]
    %v238 = vld [vmem:[#allocation7 + $0x28] sm:$0xf]
    %v239 = vld [vmem:[#allocation7 + $0x2c] sm:$0xf]
    %v240 = vld [vmem:[#allocation7 + $0x30] sm:$0xf]
    %v241 = vld [vmem:[#allocation7 + $0x34] sm:$0xf]
    %v242 = vld [vmem:[#allocation7 + $0x38] sm:$0xf]
    %v243 = vld [vmem:[#allocation7 + $0x3c] sm:$0xf]
    %v244 = vld [vmem:[#allocation7 + $0x40] sm:$0xf]
    %v245 = vld [vmem:[#allocation7 + $0x44] sm:$0xf]
    %v246 = vld [vmem:[#allocation7 + $0x48] sm:$0xf]
    %v247 = vld [vmem:[#allocation7 + $0x4c] sm:$0xf]
    %v248 = vld [vmem:[#allocation7 + $0x50] sm:$0xf]
    %v249 = vld [vmem:[#allocation7 + $0x54] sm:$0xf]
    %v250 = vld [vmem:[#allocation7 + $0x58] sm:$0xf]
    %v251 = vld [vmem:[#allocation7 + $0x5c] sm:$0xf]
    %v252 = vld [vmem:[#allocation7 + $0x60] sm:$0xf]
    %v253 = vld [vmem:[#allocation7 + $0x64] sm:$0xf]
    %v254 = vld [vmem:[#allocation7 + $0x68] sm:$0xf]
    %v255 = vld [vmem:[#allocation7 + $0x6c] sm:$0xf]
    %v256 = vld [vmem:[#allocation7 + $0x70] sm:$0xf]
    %v257 = vld [vmem:[#allocation7 + $0x74] sm:$0xf]
    %v258 = vld [vmem:[#allocation7 + $0x78] sm:$0xf]
    %v259 = vld [vmem:[#allocation7 + $0x7c] sm:$0xf]
    %v292 = vunpack.c.l.b16 %v228
    %v293 = vunpack.c.l.b16 %v229
    %v294 = vunpack.c.l.b16 %v230
    %v295 = vunpack.c.l.b16 %v231
    %v296 = vunpack.c.l.b16 %v232
    %v297 = vunpack.c.l.b16 %v233
    %v298 = vunpack.c.l.b16 %v234
    %v299 = vunpack.c.l.b16 %v235
    %v300 = vunpack.c.l.b16 %v236
    %v301 = vunpack.c.l.b16 %v237
    %v302 = vunpack.c.l.b16 %v238
    %v303 = vunpack.c.l.b16 %v239
    %v304 = vunpack.c.l.b16 %v240
    %v305 = vunpack.c.l.b16 %v241
    %v306 = vunpack.c.l.b16 %v242
    %v307 = vunpack.c.l.b16 %v243
    %v308 = vunpack.c.l.b16 %v244
    %v309 = vunpack.c.l.b16 %v245
    %v310 = vunpack.c.l.b16 %v246
    %v311 = vunpack.c.l.b16 %v247
    %v312 = vunpack.c.l.b16 %v248
    %v313 = vunpack.c.l.b16 %v249
    %v314 = vunpack.c.l.b16 %v250
    %v315 = vunpack.c.l.b16 %v251
    %v316 = vunpack.c.l.b16 %v252
    %v317 = vunpack.c.l.b16 %v253
    %v318 = vunpack.c.l.b16 %v254
    %v319 = vunpack.c.l.b16 %v255
    %v320 = vunpack.c.l.b16 %v256
    %v321 = vunpack.c.l.b16 %v257
    %v322 = vunpack.c.l.b16 %v258
    %v323 = vunpack.c.l.b16 %v259
    %v324 = vpack.c.b16 %v293, %v292
    %v325 = vpack.c.b16 %v295, %v294
    %v326 = vpack.c.b16 %v297, %v296
    %v327 = vpack.c.b16 %v299, %v298
    %v328 = vpack.c.b16 %v301, %v300
    %v329 = vpack.c.b16 %v303, %v302
    %v330 = vpack.c.b16 %v305, %v304
    %v331 = vpack.c.b16 %v307, %v306
    %v332 = vpack.c.b16 %v309, %v308
    %v333 = vpack.c.b16 %v311, %v310
    %v334 = vpack.c.b16 %v313, %v312
    %v335 = vpack.c.b16 %v315, %v314
    %v336 = vpack.c.b16 %v317, %v316
    %v337 = vpack.c.b16 %v319, %v318
    %v338 = vpack.c.b16 %v321, %v320
    %v339 = vpack.c.b16 %v323, %v322
    %356 = vmatprep.subr.bf16.mxu0 0
    %357 = vmatpush1.bf16.msra.mxu0 %v331
    %358 = vmatprep.subr.bf16.mxu0 0
    %359 = vmatpush1.bf16.msra.mxu0 %v330
    %360 = vmatprep.subr.bf16.mxu0 0
    %361 = vmatpush1.bf16.msra.mxu0 %v329
    %362 = vmatprep.subr.bf16.mxu0 0
    %363 = vmatpush1.bf16.msra.mxu0 %v328
    %364 = vmatprep.subr.bf16.mxu0 0
    %365 = vmatpush1.bf16.msra.mxu0 %v327
    %366 = vmatprep.subr.bf16.mxu0 0
    %367 = vmatpush1.bf16.msra.mxu0 %v326
    %368 = vmatprep.subr.bf16.mxu0 0
    %369 = vmatpush1.bf16.msra.mxu0 %v325
    %370 = vmatprep.subr.bf16.mxu0 0
    %371 = vmatpush1.bf16.msra.mxu0 %v324
    %372 = vmatprep.subr.bf16.mxu0 0
    %373 = vmatpush2.bf16.msra.mxu0 %v339
    %374 = vmatprep.subr.bf16.mxu0 0
    %375 = vmatpush2.bf16.msra.mxu0 %v338
    %376 = vmatprep.subr.bf16.mxu0 0
    %377 = vmatpush2.bf16.msra.mxu0 %v337
    %378 = vmatprep.subr.bf16.mxu0 0
    %379 = vmatpush2.bf16.msra.mxu0 %v336
    %380 = vmatprep.subr.bf16.mxu0 0
    %381 = vmatpush2.bf16.msra.mxu0 %v335
    %382 = vmatprep.subr.bf16.mxu0 0
    %383 = vmatpush2.bf16.msra.mxu0 %v334
    %384 = vmatprep.subr.bf16.mxu0 0
    %385 = vmatpush2.bf16.msra.mxu0 %v333
    %386 = vmatprep.subr.bf16.mxu0 0
    %387 = vmatpush2.bf16.msra.mxu0 %v332
    %388 = vmatprep.mubr.bf16.mxu0 %v227
    %389 = vmatmul.mubr.bf16.gmra.mxu0 %v226
    %v390 = vpop.f32.mrf.mxu0
    %v391 = vadd.f32 0.0, %v390
    %v392 = vpop.f32.mrf.mxu0
    %v393 = vpop.f32.mrf.mxu0
    %v394 = vadd.f32 0.0, %v393
    %v395 = vpop.f32.mrf.mxu0
    %396 = vdwg.mxu0
    %p397 = scmp.eq.s32.totalorder 0, 0
    // Predicated region
    $region34: #{tpu_custom_call.1} parent=1 // pred_check
      %p398 = pneg %p397
    $region35: #{tpu_custom_call.1} parent=1 // pred_check_branch
      %400 = sbr.rel (%p398) target = $region37
    $region36: #{tpu_custom_call.1} parent=1 // pred_region
      %v401 = vld [vmem:[%s4] sm:$0x1]
      %v403 = vlaneseq
      %v404 = vshrl.u32 %v403, 7
      %v405 = vsub.s32 0, %v404
      %v406 = vrot.slane %v401, %v405
      %v408 = vadd.f32 %v391, %v406
      %v409 = vadd.f32 %v394, %v406
      %410 = vst [vmem:[#allocation8] sm:$0xff] %v408
      %411 = vst [vmem:[#allocation8 + $0x8] sm:$0xff] %v409
    $region37: #{tpu_custom_call.1} parent=1 // pred_fallthru
      _
    %p412 = scmp.gt.s32.totalorder 0, 0
    // Predicated region
    $region38: #{tpu_custom_call.1} parent=1 // pred_check
      %p413 = pneg %p412
    $region39: #{tpu_custom_call.1} parent=1 // pred_check_branch
      %415 = sbr.rel (%p413) target = $region41
    $region40: #{tpu_custom_call.1} parent=1 // pred_region
      %v416 = vld [vmem:[#allocation8] sm:$0xff]
      %v417 = vld [vmem:[#allocation8 + $0x8] sm:$0xff]
      %v418 = vadd.f32 %v416, %v391
      %v419 = vadd.f32 %v417, %v394
      %420 = vst [vmem:[#allocation8] sm:$0xff] %v418
      %421 = vst [vmem:[#allocation8 + $0x8] sm:$0xff] %v419
    $region41: #{tpu_custom_call.1} parent=1 // pred_fallthru
      _
    // Predicated region
    $region42: #{tpu_custom_call.1} parent=1 // pred_check
      _
    $region43: #{tpu_custom_call.1} parent=1 // pred_check_branch
      %423 = sbr.rel (0) target = $region45
    $region44: #{tpu_custom_call.1} parent=1 // pred_region
      %s425 = ssub.s32 256, 256
      %426 = vsyncadd [#allocation4], %s425
      %s427 = sshll.u32 [#allocation8], 4
      %s428 = int_to_ptr.vmem [resolvable:$true] %s427
      %433 = dma.vmem_to_hbm [thread:$0]  %s428, 256, %s5, [#allocation4], 128, 128, 8
    $region45: #{tpu_custom_call.1} parent=1 // pred_fallthru
      _
    // Predicated region
    $region46: #{tpu_custom_call.1} parent=1 // pred_check
      _
    $region47: #{tpu_custom_call.1} parent=1 // pred_check_branch
      %435 = sbr.rel (0) target = $region49
    $region48: #{tpu_custom_call.1} parent=1 // pred_region
      %436 = dma.done [#allocation4], 256
    $region49: #{tpu_custom_call.1} parent=1 // pred_fallthru
      _
    %437 = vsyncpa [#allocation3], 1
    %438 = vsyncpa [#allocation6], 1
    %439 = vsyncpa [#allocation4], 1

</llo_original>
